<compile_context>
chip_gen: v5e
topology: v5e:2x2
jax: 0.10.0
libtpu: 0.0.40
codegen_flags: <defaults>
</compile_context>

<pallas_src>
import functools

import jax
import jax.numpy as jnp
from jax.experimental import pallas as pl
from jax.experimental.pallas import tpu as pltpu


def _round_up(x, m):
    return ((x + m - 1) // m) * m


def _vmem_cap_bytes():
    """~80% of physical VMEM (leave headroom for compiler scratch/pipeline)."""
    try:
        info = pltpu.get_tpu_info()
        phys = int(getattr(info, "vmem_capacity_bytes", 64 * 1024 * 1024))
    except Exception:
        phys = 64 * 1024 * 1024
    return max(int(phys * 0.8), 32 * 1024 * 1024)


def classifier_kernel(x_ref, w1_ref, b1_ref, w2_ref, b2_ref, o_ref):
    # x tile arrives f32; cast to bf16 in-kernel (VPU has slack) so the wrapper
    # never writes a bf16 copy of the whole batch back to HBM.
    x = x_ref[...].astype(jnp.bfloat16)
    # hidden = relu(x @ W1 + b1): bf16 MXU operands, f32 accumulation,
    # f32 epilogue (bias + ReLU) on the VPU.
    h = jnp.dot(x, w1_ref[...], preferred_element_type=jnp.float32)
    h = jnp.maximum(h + b1_ref[...], 0.0)
    # Dropout is identity in eval mode.
    out = jnp.dot(h.astype(jnp.bfloat16), w2_ref[...],
                  preferred_element_type=jnp.float32)
    o_ref[...] = (out + b2_ref[...]).astype(o_ref.dtype)


def prepare_params(w1, b1, w2, b2):
    """One-time lane-dense padding (to multiples of 128) + bf16 cast of weights.

    Zero-padding is numerically exact for this MLP: padded b1 columns give
    relu(0) = 0 and padded W2 rows are 0. Done once at param-load time so the
    per-call forward never re-reads / re-writes the weights in HBM."""
    w1 = jnp.asarray(w1, jnp.float32)
    w2 = jnp.asarray(w2, jnp.float32)
    b1 = jnp.asarray(b1, jnp.float32).reshape(1, -1)
    b2 = jnp.asarray(b2, jnp.float32).reshape(1, -1)
    D = w1.shape[0]
    C = w2.shape[-1]
    Dp = _round_up(D, 128)
    Cp = _round_up(C, 128)
    w1p = jnp.pad(w1, ((0, Dp - D), (0, Dp - D))).astype(jnp.bfloat16)
    w2p = jnp.pad(w2, ((0, Dp - D), (0, Cp - C))).astype(jnp.bfloat16)
    b1p = jnp.pad(b1, ((0, 0), (0, Dp - D)))
    b2p = jnp.pad(b2, ((0, 0), (0, Cp - C)))
    return w1p, b1p, w2p, b2p


@functools.partial(jax.jit,
                   static_argnames=("class_num", "block_b", "force_pallas"))
def classifier_forward(emd, w1p, b1p, w2p, b2p, *, class_num,
                       block_b=2048, force_pallas=False):
    """emd: (B, D) f32; w1p/b1p/w2p/b2p: pre-padded params from prepare_params."""
    B, D = emd.shape
    Dp = w1p.shape[0]
    Cp = w2p.shape[-1]
    C = class_num

    # Small-problem fast path: single tiny tile -> pad/call/slice overhead
    # dominates, plain XLA is faster. (Same bf16-operand math as the kernel.)
    if not force_pallas and Dp <= 128 and Cp <= 128 and B * Dp <= 128 * 128:
        xb = emd.astype(jnp.bfloat16)
        h = jnp.maximum(
            jnp.dot(xb, w1p[:D, :D], preferred_element_type=jnp.float32)
            + b1p[0, :D], 0.0)
        out = jnp.dot(h.astype(jnp.bfloat16), w2p[:D, :C],
                      preferred_element_type=jnp.float32) + b2p[0, :C]
        return out.astype(emd.dtype)

    # --- batch tiling ---------------------------------------------------
    # TB multiple of 16 (covers f32 sublane=8 and bf16 packing).
    Bp0 = _round_up(B, 16)
    TB = min(_round_up(max(min(block_b, B), 16), 16), Bp0)
    # v7x megacore: if a large batch collapsed to a single tile, split it into
    # two so the "parallel" grid axis gives both TensorCores work.
    if Bp0 >= 2048 and TB >= Bp0:
        TB = _round_up((Bp0 + 1) // 2, 16)

    cap = _vmem_cap_bytes()

    def _est(tb):
        return (2 * tb * Dp * 4              # double-buffered f32 x tiles
                + 2 * tb * Cp * 4            # double-buffered f32 out tiles
                + Dp * Dp * 2 + Dp * Cp * 2  # resident bf16 W1 / W2
                + (Dp + Cp) * 4              # biases
                + tb * Dp * 6 + tb * Cp * 4)  # f32 hidden + in-kernel bf16 casts

    # Shrink TB until the resident weights + pipeline buffers fit the cap.
    while TB > 256 and _est(TB) > cap:
        TB = max(_round_up(TB // 2, 16), 256)

    Bp = _round_up(B, TB)
    vmem_limit = min(max(int(_est(TB) * 1.5), 16 * 1024 * 1024), cap)

    # Pad x only when needed (no-op copy avoided when already aligned).
    if Bp != B or Dp != D:
        xp = jnp.pad(emd, ((0, Bp - B), (0, Dp - D)))
    else:
        xp = emd

    out = pl.pallas_call(
        classifier_kernel,
        out_shape=jax.ShapeDtypeStruct((Bp, Cp), jnp.float32),
        grid=(Bp // TB,),
        in_specs=[
            pl.BlockSpec((TB, Dp), lambda i: (i, 0)),   # x: streamed over batch (f32)
            pl.BlockSpec((Dp, Dp), lambda i: (0, 0)),   # W1: VMEM-resident bf16
            pl.BlockSpec((1, Dp), lambda i: (0, 0)),    # b1: VMEM-resident f32
            pl.BlockSpec((Dp, Cp), lambda i: (0, 0)),   # W2: VMEM-resident bf16
            pl.BlockSpec((1, Cp), lambda i: (0, 0)),    # b2: VMEM-resident f32
        ],
        out_specs=pl.BlockSpec((TB, Cp), lambda i: (i, 0)),
        compiler_params=pltpu.CompilerParams(
            dimension_semantics=("parallel",),
            vmem_limit_bytes=vmem_limit,
        ),
    )(xp, w1p, b1p, w2p, b2p)
    return out[:B, :C].astype(emd.dtype)


def init_params(key, input_dim, class_num):
    """Deterministic synthetic init mirroring Classifier.reset_parameter():
    kaiming_uniform_(a=0, mode='fan_in', nonlinearity='relu') on weights
    => U(-bound, bound) with bound = sqrt(6 / fan_in); zeros for biases.
    Weights are stored transposed vs. PyTorch so the kernel computes x @ W + b."""
    k1, k2 = jax.random.split(key)
    bound = (6.0 / input_dim) ** 0.5   # fan_in = input_dim for both layers
    w1 = jax.random.uniform(k1, (input_dim, input_dim), jnp.float32,
                            minval=-bound, maxval=bound)
    b1 = jnp.zeros((input_dim,), jnp.float32)
    w2 = jax.random.uniform(k2, (input_dim, class_num), jnp.float32,
                            minval=-bound, maxval=bound)
    b2 = jnp.zeros((class_num,), jnp.float32)
    return w1, b1, w2, b2


if __name__ == "__main__":
    key = jax.random.PRNGKey(0)
    k_x, k_p, k_x2 = jax.random.split(key, 3)

    batch, input_dim, class_num = 8, 32, 1
    emd = jax.random.normal(k_x, (batch, input_dim), jnp.float32)
    w1, b1, w2, b2 = init_params(k_p, input_dim, class_num)
    w1p, b1p, w2p, b2p = prepare_params(w1, b1, w2, b2)

    ref_fn = lambda x: jnp.maximum(x @ w1 + b1[None, :], 0.0) @ w2 + b2[None, :]

    # 1) Exercise the Pallas path explicitly at the small test shape.
    out = classifier_forward(emd, w1p, b1p, w2p, b2p,
                             class_num=class_num, force_pallas=True)
    jax.block_until_ready(out)
    ref = ref_fn(emd)
    assert out.shape == (batch, class_num)
    assert jnp.allclose(out, ref, atol=5e-2, rtol=5e-2)

    # 2) Default dispatch (fast path at this tiny size) stays consistent.
    out2 = classifier_forward(emd, w1p, b1p, w2p, b2p, class_num=class_num)
    jax.block_until_ready(out2)
    assert jnp.allclose(out2, ref, atol=5e-2, rtol=5e-2)

    # 3) Multi-step grid + batch padding path (grid=(3,) with TB=16, B=40).
    emd2 = jax.random.normal(k_x2, (40, input_dim), jnp.float32)
    out3 = classifier_forward(emd2, w1p, b1p, w2p, b2p,
                              class_num=class_num, block_b=16, force_pallas=True)
    jax.block_until_ready(out3)
    assert out3.shape == (40, class_num)
    assert jnp.allclose(out3, ref_fn(emd2), atol=5e-2, rtol=5e-2)

    print("KERNEL_OK")
</pallas_src>

<mosaic_0001>
module attributes {stable_mosaic.version = 11 : i64} {
  func.func @classifier_kernel(%arg0: i32, %arg1: memref<16x128xf32, #tpu.memory_space<vmem>>, %arg2: memref<128x128xbf16, #tpu.memory_space<vmem>>, %arg3: memref<1x128xf32, #tpu.memory_space<vmem>>, %arg4: memref<128x128xbf16, #tpu.memory_space<vmem>>, %arg5: memref<1x128xf32, #tpu.memory_space<vmem>>, %arg6: memref<16x128xf32, #tpu.memory_space<vmem>>) attributes {dimension_semantics = [#tpu.dimension_semantics<parallel>], iteration_bounds = array<i64: 1>, scalar_prefetch = 0 : i64, scratch_operands = 0 : i64, tpu.core_type = #tpu.core_type<tc>, window_params = [{transform_indices = @transform_0, window_bounds = array<i64: 16, 128>}, {pipeline_mode = #tpu.pipeline_mode<synchronous>, transform_indices = @transform_1, window_bounds = array<i64: 128, 128>}, {pipeline_mode = #tpu.pipeline_mode<synchronous>, transform_indices = @transform_2, window_bounds = array<i64: 1, 128>}, {pipeline_mode = #tpu.pipeline_mode<synchronous>, transform_indices = @transform_3, window_bounds = array<i64: 128, 128>}, {pipeline_mode = #tpu.pipeline_mode<synchronous>, transform_indices = @transform_4, window_bounds = array<i64: 1, 128>}, {transform_indices = @transform_5, window_bounds = array<i64: 16, 128>}]} {
    %c0 = arith.constant 0 : index
    %c0_0 = arith.constant 0 : index
    %0 = vector.load %arg1[%c0, %c0_0] : memref<16x128xf32, #tpu.memory_space<vmem>>, vector<16x128xf32>
    %1 = arith.truncf %0 : vector<16x128xf32> to vector<16x128xbf16>
    %c0_1 = arith.constant 0 : index
    %c0_2 = arith.constant 0 : index
    %2 = vector.load %arg2[%c0_1, %c0_2] : memref<128x128xbf16, #tpu.memory_space<vmem>>, vector<128x128xbf16>
    %cst = arith.constant dense<0.000000e+00> : vector<16x128xf32>
    %3 = tpu.matmul %1, %2, %cst {dimension_numbers = #tpu.dot_dimension_numbers<[1], [0], [0], [1], [0, 0, 1, 1], [], []>} : vector<16x128xbf16>, vector<128x128xbf16>, vector<16x128xf32> -> vector<16x128xf32>
    %c0_3 = arith.constant 0 : index
    %c0_4 = arith.constant 0 : index
    %4 = vector.load %arg3[%c0_3, %c0_4] : memref<1x128xf32, #tpu.memory_space<vmem>>, vector<1x128xf32>
    %5 = vector.broadcast %4 : vector<1x128xf32> to vector<16x128xf32>
    %6 = arith.addf %3, %5 : vector<16x128xf32>
    %cst_5 = arith.constant 0.000000e+00 : f32
    %7 = vector.broadcast %cst_5 : f32 to vector<16x128xf32>
    %8 = arith.maximumf %6, %7 : vector<16x128xf32>
    %9 = arith.truncf %8 : vector<16x128xf32> to vector<16x128xbf16>
    %c0_6 = arith.constant 0 : index
    %c0_7 = arith.constant 0 : index
    %10 = vector.load %arg4[%c0_6, %c0_7] : memref<128x128xbf16, #tpu.memory_space<vmem>>, vector<128x128xbf16>
    %cst_8 = arith.constant dense<0.000000e+00> : vector<16x128xf32>
    %11 = tpu.matmul %9, %10, %cst_8 {dimension_numbers = #tpu.dot_dimension_numbers<[1], [0], [0], [1], [0, 0, 1, 1], [], []>} : vector<16x128xbf16>, vector<128x128xbf16>, vector<16x128xf32> -> vector<16x128xf32>
    %c0_9 = arith.constant 0 : index
    %c0_10 = arith.constant 0 : index
    %12 = vector.load %arg5[%c0_9, %c0_10] : memref<1x128xf32, #tpu.memory_space<vmem>>, vector<1x128xf32>
    %13 = vector.broadcast %12 : vector<1x128xf32> to vector<16x128xf32>
    %14 = arith.addf %11, %13 : vector<16x128xf32>
    %c0_11 = arith.constant 0 : index
    %c0_12 = arith.constant 0 : index
    %15 = vector.load %arg6[%c0_11, %c0_12] : memref<16x128xf32, #tpu.memory_space<vmem>>, vector<16x128xf32>
    tpu.vector_store %arg6[%c0_11, %c0_12], %14 {strides = array<i32>} : memref<16x128xf32, #tpu.memory_space<vmem>>, vector<16x128xf32>,
    return
  }
  func.func @transform_0(%arg0: i32) -> (i32, i32) {
    %c0_i32 = arith.constant 0 : i32
    %c0_i32_0 = arith.constant 0 : i32
    return %arg0, %c0_i32 : i32, i32
  }
  func.func @transform_1(%arg0: i32) -> (i32, i32) {
    %c0_i32 = arith.constant 0 : i32
    %c0_i32_0 = arith.constant 0 : i32
    %c0_i32_1 = arith.constant 0 : i32
    return %c0_i32, %c0_i32_0 : i32, i32
  }
  func.func @transform_2(%arg0: i32) -> (i32, i32) {
    %c0_i32 = arith.constant 0 : i32
    %c0_i32_0 = arith.constant 0 : i32
    %c0_i32_1 = arith.constant 0 : i32
    return %c0_i32, %c0_i32_0 : i32, i32
  }
  func.func @transform_3(%arg0: i32) -> (i32, i32) {
    %c0_i32 = arith.constant 0 : i32
    %c0_i32_0 = arith.constant 0 : i32
    %c0_i32_1 = arith.constant 0 : i32
    return %c0_i32, %c0_i32_0 : i32, i32
  }
  func.func @transform_4(%arg0: i32) -> (i32, i32) {
    %c0_i32 = arith.constant 0 : i32
    %c0_i32_0 = arith.constant 0 : i32
    %c0_i32_1 = arith.constant 0 : i32
    return %c0_i32, %c0_i32_0 : i32, i32
  }
  func.func @transform_5(%arg0: i32) -> (i32, i32) {
    %c0_i32 = arith.constant 0 : i32
    %c0_i32_0 = arith.constant 0 : i32
    return %arg0, %c0_i32 : i32, i32
  }
}

</mosaic_0001>

<llo_original>
// kernel: classifier_forward.1
$region0: #{classifier_forward.1}
  #allocation0 [shape = 'u32[]', space=smem, size = 0x4, offset = 0x4, fixed_abs, tag = 'smem constant byte address 0x4 - core index']
  #allocation1 [shape = 'u32[72,128]{1,0:T(1,128)}', space=vmem, size = 0x9000, scoped, tag = 'internal scratch']
  %s0 = inlined_call_operand.vmem [shape: f32[16,128], index: 0, kind: input, shape index: {}]
  %s1 = inlined_call_operand.hbm [shape: bf16[128,128], index: 1, kind: input, shape index: {}]
  %s2 = inlined_call_operand.vmem [shape: f32[1,128], index: 2, kind: input, shape index: {}]
  %s3 = inlined_call_operand.hbm [shape: bf16[128,128], index: 3, kind: input, shape index: {}]
  %s4 = inlined_call_operand.vmem [shape: f32[1,128], index: 4, kind: input, shape index: {}]
  %s5 = inlined_call_operand.vmem [shape: f32[16,128], index: 5, kind: output, shape index: {}]
  %s6 = sld [smem:[#allocation0]]
  $region38: #{classifier_forward.1} parent=0
    _
  %s8 = ssub.s32 1, %s6
  %s9 = scalar_select 0, %s8, %s6
  $region1: #{classifier_forward.1} parent=0
    #allocation2 [shape = 'u8[32768]{0}', space=vmem, size = 0x8000, scoped, tag = 'input window, operand 1, single buffered']
    #allocation3 [shape = 's32[1]{0}', space=sflag, size = 0x4, scoped, tag = 'scoped memory for classifier_forward.1']
    #allocation4 [shape = 'u8[32768]{0}', space=vmem, size = 0x8000, scoped, tag = 'input window, operand 3, single buffered']
    #allocation5 [shape = 's32[1]{0}', space=sflag, size = 0x4, scoped, tag = 'scoped memory for classifier_forward.1']
    %10 = vsyncpa [#allocation3], 0
    %11 = vsyncpa [#allocation5], 0
    // Predicated region
    $region2: #{classifier_forward.1} parent=1 // pred_check
      _
    $region3: #{classifier_forward.1} parent=1 // pred_check_branch
      %13 = sbr.rel (0) target = $region5
    $region4: #{classifier_forward.1} parent=1 // pred_region
      _
    $region5: #{classifier_forward.1} parent=1 // pred_fallthru
      _
    // Predicated region
    $region6: #{classifier_forward.1} parent=1 // pred_check
      _
    $region7: #{classifier_forward.1} parent=1 // pred_check_branch
      %15 = sbr.rel (0) target = $region9
    $region8: #{classifier_forward.1} parent=1 // pred_region
      %17 = vsyncadd [#allocation3], 0
      %s18 = sshll.u32 %s1, 4
      %s19 = int_to_ptr.hbm [resolvable:$true] %s18
      %s20 = sshll.u32 [#allocation2], 4
      %s21 = int_to_ptr.vmem [resolvable:$true] %s20
      %26 = dma.hbm_to_vmem [thread:$0]  %s19, 1024, %s21, [#allocation3], 64, 64, 4
    $region9: #{classifier_forward.1} parent=1 // pred_fallthru
      _
    // Predicated region
    $region10: #{classifier_forward.1} parent=1 // pred_check
      _
    $region11: #{classifier_forward.1} parent=1 // pred_check_branch
      %28 = sbr.rel (0) target = $region13
    $region12: #{classifier_forward.1} parent=1 // pred_region
      _
    $region13: #{classifier_forward.1} parent=1 // pred_fallthru
      _
    // Predicated region
    $region14: #{classifier_forward.1} parent=1 // pred_check
      _
    $region15: #{classifier_forward.1} parent=1 // pred_check_branch
      %30 = sbr.rel (0) target = $region17
    $region16: #{classifier_forward.1} parent=1 // pred_region
      %32 = vsyncadd [#allocation5], 0
      %s33 = sshll.u32 %s3, 4
      %s34 = int_to_ptr.hbm [resolvable:$true] %s33
      %s35 = sshll.u32 [#allocation4], 4
      %s36 = int_to_ptr.vmem [resolvable:$true] %s35
      %41 = dma.hbm_to_vmem [thread:$0]  %s34, 1024, %s36, [#allocation5], 64, 64, 4
    $region17: #{classifier_forward.1} parent=1 // pred_fallthru
      _
    // Predicated region
    $region18: #{classifier_forward.1} parent=1 // pred_check
      _
    $region19: #{classifier_forward.1} parent=1 // pred_check_branch
      %43 = sbr.rel (0) target = $region21
    $region20: #{classifier_forward.1} parent=1 // pred_region
      _
    $region21: #{classifier_forward.1} parent=1 // pred_fallthru
      _
    // Predicated region
    $region22: #{classifier_forward.1} parent=1 // pred_check
      _
    $region23: #{classifier_forward.1} parent=1 // pred_check_branch
      %45 = sbr.rel (0) target = $region25
    $region24: #{classifier_forward.1} parent=1 // pred_region
      %47 = dma.done [#allocation3], 1024
    $region25: #{classifier_forward.1} parent=1 // pred_fallthru
      _
    // Predicated region
    $region26: #{classifier_forward.1} parent=1 // pred_check
      _
    $region27: #{classifier_forward.1} parent=1 // pred_check_branch
      %49 = sbr.rel (0) target = $region29
    $region28: #{classifier_forward.1} parent=1 // pred_region
      %51 = dma.done [#allocation5], 1024
    $region29: #{classifier_forward.1} parent=1 // pred_fallthru
      _
    %v52 = vld [vmem:[%s0] sm:$0xff]
    %v53 = vld [vmem:[%s0 + $0x8] sm:$0xff]
    %v54 = vpack.c.bf16 %v53, %v52
    %v55 = vld [vmem:[#allocation2] sm:$0xf]
    %v56 = vld [vmem:[#allocation2 + $0x4] sm:$0xf]
    %v57 = vld [vmem:[#allocation2 + $0x8] sm:$0xf]
    %v58 = vld [vmem:[#allocation2 + $0xc] sm:$0xf]
    %v59 = vld [vmem:[#allocation2 + $0x10] sm:$0xf]
    %v60 = vld [vmem:[#allocation2 + $0x14] sm:$0xf]
    %v61 = vld [vmem:[#allocation2 + $0x18] sm:$0xf]
    %v62 = vld [vmem:[#allocation2 + $0x1c] sm:$0xf]
    %v63 = vld [vmem:[#allocation2 + $0x20] sm:$0xf]
    %v64 = vld [vmem:[#allocation2 + $0x24] sm:$0xf]
    %v65 = vld [vmem:[#allocation2 + $0x28] sm:$0xf]
    %v66 = vld [vmem:[#allocation2 + $0x2c] sm:$0xf]
    %v67 = vld [vmem:[#allocation2 + $0x30] sm:$0xf]
    %v68 = vld [vmem:[#allocation2 + $0x34] sm:$0xf]
    %v69 = vld [vmem:[#allocation2 + $0x38] sm:$0xf]
    %v70 = vld [vmem:[#allocation2 + $0x3c] sm:$0xf]
    %v71 = vld [vmem:[%s2] sm:$0x1]
    %v73 = vperm.slane %v71, 0
    %v91 = vunpack.c.l.b16 %v55
    %v92 = vunpack.c.l.b16 %v56
    %v93 = vunpack.c.l.b16 %v57
    %v94 = vunpack.c.l.b16 %v58
    %v95 = vunpack.c.l.b16 %v59
    %v96 = vunpack.c.l.b16 %v60
    %v97 = vunpack.c.l.b16 %v61
    %v98 = vunpack.c.l.b16 %v62
    %v99 = vunpack.c.l.b16 %v63
    %v100 = vunpack.c.l.b16 %v64
    %v101 = vunpack.c.l.b16 %v65
    %v102 = vunpack.c.l.b16 %v66
    %v103 = vunpack.c.l.b16 %v67
    %v104 = vunpack.c.l.b16 %v68
    %v105 = vunpack.c.l.b16 %v69
    %v106 = vunpack.c.l.b16 %v70
    %v107 = vpack.c.b16 %v92, %v91
    %v108 = vpack.c.b16 %v94, %v93
    %v109 = vpack.c.b16 %v96, %v95
    %v110 = vpack.c.b16 %v98, %v97
    %v111 = vpack.c.b16 %v100, %v99
    %v112 = vpack.c.b16 %v102, %v101
    %v113 = vpack.c.b16 %v104, %v103
    %v114 = vpack.c.b16 %v106, %v105
    %123 = vmatpush.bf16.msra.mxu0 %v114
    %124 = vmatpush.bf16.msra.mxu0 %v113
    %125 = vmatpush.bf16.msra.mxu0 %v112
    %126 = vmatpush.bf16.msra.mxu0 %v111
    %127 = vmatpush.bf16.msra.mxu0 %v110
    %128 = vmatpush.bf16.msra.mxu0 %v109
    %129 = vmatpush.bf16.msra.mxu0 %v108
    %130 = vmatpush.bf16.msra.mxu0 %v107
    %131 = vmatmul.bf16.gmra.mxu0 %v54
    %v132 = vpop.f32.mrf.mxu0
    %v133 = vadd.f32 %v73, %v132
    %v134 = vpop.f32.mrf.mxu0
    %v135 = vadd.f32 %v73, %v134
    %136 = vdwg.mxu0
    %v137 = vmax.f32 %v133, 0.0
    %v138 = vmax.f32 %v135, 0.0
    %v139 = vpack.c.bf16 %v138, %v137
    %v140 = vld [vmem:[#allocation4] sm:$0xf]
    %v141 = vld [vmem:[#allocation4 + $0x4] sm:$0xf]
    %v142 = vld [vmem:[#allocation4 + $0x8] sm:$0xf]
    %v143 = vld [vmem:[#allocation4 + $0xc] sm:$0xf]
    %v144 = vld [vmem:[#allocation4 + $0x10] sm:$0xf]
    %v145 = vld [vmem:[#allocation4 + $0x14] sm:$0xf]
    %v146 = vld [vmem:[#allocation4 + $0x18] sm:$0xf]
    %v147 = vld [vmem:[#allocation4 + $0x1c] sm:$0xf]
    %v148 = vld [vmem:[#allocation4 + $0x20] sm:$0xf]
    %v149 = vld [vmem:[#allocation4 + $0x24] sm:$0xf]
    %v150 = vld [vmem:[#allocation4 + $0x28] sm:$0xf]
    %v151 = vld [vmem:[#allocation4 + $0x2c] sm:$0xf]
    %v152 = vld [vmem:[#allocation4 + $0x30] sm:$0xf]
    %v153 = vld [vmem:[#allocation4 + $0x34] sm:$0xf]
    %v154 = vld [vmem:[#allocation4 + $0x38] sm:$0xf]
    %v155 = vld [vmem:[#allocation4 + $0x3c] sm:$0xf]
    %v156 = vld [vmem:[%s4] sm:$0x1]
    %v158 = vperm.slane %v156, 0
    %v176 = vunpack.c.l.b16 %v140
    %v177 = vunpack.c.l.b16 %v141
    %v178 = vunpack.c.l.b16 %v142
    %v179 = vunpack.c.l.b16 %v143
    %v180 = vunpack.c.l.b16 %v144
    %v181 = vunpack.c.l.b16 %v145
    %v182 = vunpack.c.l.b16 %v146
    %v183 = vunpack.c.l.b16 %v147
    %v184 = vunpack.c.l.b16 %v148
    %v185 = vunpack.c.l.b16 %v149
    %v186 = vunpack.c.l.b16 %v150
    %v187 = vunpack.c.l.b16 %v151
    %v188 = vunpack.c.l.b16 %v152
    %v189 = vunpack.c.l.b16 %v153
    %v190 = vunpack.c.l.b16 %v154
    %v191 = vunpack.c.l.b16 %v155
    %v192 = vpack.c.b16 %v177, %v176
    %v193 = vpack.c.b16 %v179, %v178
    %v194 = vpack.c.b16 %v181, %v180
    %v195 = vpack.c.b16 %v183, %v182
    %v196 = vpack.c.b16 %v185, %v184
    %v197 = vpack.c.b16 %v187, %v186
    %v198 = vpack.c.b16 %v189, %v188
    %v199 = vpack.c.b16 %v191, %v190
    %208 = vmatpush.bf16.msra.mxu0 %v199
    %209 = vmatpush.bf16.msra.mxu0 %v198
    %210 = vmatpush.bf16.msra.mxu0 %v197
    %211 = vmatpush.bf16.msra.mxu0 %v196
    %212 = vmatpush.bf16.msra.mxu0 %v195
    %213 = vmatpush.bf16.msra.mxu0 %v194
    %214 = vmatpush.bf16.msra.mxu0 %v193
    %215 = vmatpush.bf16.msra.mxu0 %v192
    %216 = vmatmul.bf16.gmra.mxu0 %v139
    %v217 = vpop.f32.mrf.mxu0
    %v218 = vadd.f32 %v158, %v217
    %v219 = vpop.f32.mrf.mxu0
    %v220 = vadd.f32 %v158, %v219
    %221 = vdwg.mxu0
    %222 = vst [vmem:[%s5] sm:$0xff] %v218
    %223 = vst [vmem:[%s5 + $0x8] sm:$0xff] %v220
    // Predicated region
    $region30: #{classifier_forward.1} parent=1 // pred_check
      _
    $region31: #{classifier_forward.1} parent=1 // pred_check_branch
      %225 = sbr.rel (0) target = $region33
    $region32: #{classifier_forward.1} parent=1 // pred_region
      _
    $region33: #{classifier_forward.1} parent=1 // pred_fallthru
      _
    // Predicated region
    $region34: #{classifier_forward.1} parent=1 // pred_check
      _
    $region35: #{classifier_forward.1} parent=1 // pred_check_branch
      %227 = sbr.rel (0) target = $region37
    $region36: #{classifier_forward.1} parent=1 // pred_region
      _
    $region37: #{classifier_forward.1} parent=1 // pred_fallthru
      _
    %228 = vsyncpa [#allocation3], 1
    %229 = vsyncpa [#allocation5], 1

</llo_original>
